<compile_context>
chip_gen: v6e
topology: v6e:2x2x1
jax: 0.10.0
libtpu: 0.0.40
codegen_flags: <defaults>
</compile_context>

<pallas_src>
import functools

import jax
import jax.numpy as jnp
from jax.experimental import pallas as pl
from jax.experimental.pallas import tpu as pltpu

NEG_SLOPE = 0.2     # LeakyReLU(0.2) used by NLayerDiscriminator
BN_EPS = 1e-5       # nn.BatchNorm2d default eps
ROW_TILE = 512      # rows per (ROW_TILE, 128) streaming reduction tile


def _round_up(x, m):
    return ((x + m - 1) // m) * m


# ---------------------------------------------------------------------------
# Fused tap-decomposed convolution.
#
# Grid = (B, OH, OCp // tn, k*k).  For grid point (b, oh, j, t):
#   * LHS block  = padded input row (1, 1, Wp, C) at H offset oh + t // k
#   * RHS block  = per-tap weight matrix (1, C, tn) at (t, 0, j)
#   * output     = (1, 1, OW, tn) at (b, oh, 0, j), written on the last tap
#   * f32 VMEM accumulator (OW, tn), init on tap 0 (pl.when pattern)
# The kw offset is a dynamic contiguous pl.ds slice of the row inside the
# kernel, so no im2col patches are ever materialized in HBM.
# ---------------------------------------------------------------------------

def _conv_act_kernel(x_ref, w_ref, b_ref, y_ref, acc_ref, *, k, k2, ow, act):
    t = pl.program_id(3)

    @pl.when(t == 0)
    def _():
        acc_ref[...] = jnp.zeros_like(acc_ref)

    kw = t % k
    xw = x_ref[0, 0, pl.ds(kw, ow), :]                       # (OW, C) bf16
    acc_ref[...] += jnp.dot(xw, w_ref[0],
                            preferred_element_type=jnp.float32)

    @pl.when(t == k2 - 1)
    def _():
        y = acc_ref[...] + b_ref[...]                        # (OW,tn)+(1,tn)
        if act:                                              # LeakyReLU(0.2)
            y = jnp.where(y > 0, y, NEG_SLOPE * y)
        y_ref[0, 0] = y.astype(y_ref.dtype)


def _conv_bnstats_kernel(x_ref, w_ref, y_ref, s_ref, q_ref, acc_ref,
                         *, k, k2, ow):
    t = pl.program_id(3)

    @pl.when(t == 0)
    def _():
        acc_ref[...] = jnp.zeros_like(acc_ref)

    kw = t % k
    xw = x_ref[0, 0, pl.ds(kw, ow), :]
    acc_ref[...] += jnp.dot(xw, w_ref[0],
                            preferred_element_type=jnp.float32)

    @pl.when(t == k2 - 1)
    def _():
        y = acc_ref[...]                                     # conv bias=False
        y_ref[0, 0] = y.astype(y_ref.dtype)                  # bf16 pre-act
        # Fused BatchNorm statistics: per-(b, oh) channel partials (f32).
        s_ref[0, 0] = jnp.sum(y, axis=0, keepdims=True)
        q_ref[0, 0] = jnp.sum(y * y, axis=0, keepdims=True)


def _fused_conv(xp, wt, *, k, bias=None, act=False, out_dtype=jnp.bfloat16,
                emit_stats=False):
    """Fused conv over a pre-padded NHWC activation.

    xp : (B, Hp, Wp, C) padded input, bf16
    wt : (k*k, C, OCp)  per-tap weight matrices, bf16, OCp % 128 == 0
    Returns (B, OH, OW, OCp) [, per-(b,oh) channel sum, sumsq partials]."""
    B, Hp, Wp, C = xp.shape
    k2, Cw, OCp = wt.shape
    assert k2 == k * k and Cw == C
    OH, OW = Hp - k + 1, Wp - k + 1
    tn = 256 if OCp % 256 == 0 else 128          # feed the 256-wide MXU
    grid = (B, OH, OCp // tn, k2)

    x_spec = pl.BlockSpec((1, 1, Wp, C),
                          lambda b, h, j, t: (b, h + t // k, 0, 0))
    w_spec = pl.BlockSpec((1, C, tn), lambda b, h, j, t: (t, 0, j))
    y_spec = pl.BlockSpec((1, 1, OW, tn), lambda b, h, j, t: (b, h, 0, j))
    sem = ("parallel", "parallel", "parallel", "arbitrary")

    if emit_stats:
        kern = functools.partial(_conv_bnstats_kernel, k=k, k2=k2, ow=OW)
        st_spec = pl.BlockSpec((1, 1, 1, tn), lambda b, h, j, t: (b, h, 0, j))
        return pl.pallas_call(
            kern,
            out_shape=(jax.ShapeDtypeStruct((B, OH, OW, OCp), out_dtype),
                       jax.ShapeDtypeStruct((B, OH, 1, OCp), jnp.float32),
                       jax.ShapeDtypeStruct((B, OH, 1, OCp), jnp.float32)),
            grid=grid,
            in_specs=[x_spec, w_spec],
            out_specs=(y_spec, st_spec, st_spec),
            scratch_shapes=[pltpu.VMEM((OW, tn), jnp.float32)],
            compiler_params=pltpu.CompilerParams(dimension_semantics=sem),
        )(xp, wt)

    kern = functools.partial(_conv_act_kernel, k=k, k2=k2, ow=OW, act=act)
    b_spec = pl.BlockSpec((1, tn), lambda b, h, j, t: (0, j))
    return pl.pallas_call(
        kern,
        out_shape=jax.ShapeDtypeStruct((B, OH, OW, OCp), out_dtype),
        grid=grid,
        in_specs=[x_spec, w_spec, b_spec],
        out_specs=y_spec,
        scratch_shapes=[pltpu.VMEM((OW, tn), jnp.float32)],
        compiler_params=pltpu.CompilerParams(dimension_semantics=sem),
    )(xp, wt, bias)


# ------------------- BatchNorm affine + LeakyReLU (2nd pass) -----------------

def _affine_lrelu_kernel(x_ref, s_ref, b_ref, o_ref):
    x = x_ref[0, 0].astype(jnp.float32)                      # (OW, C)
    y = x * s_ref[0] + b_ref[0]                              # (1, C) bcast
    o_ref[0, 0] = jnp.where(y > 0, y, NEG_SLOPE * y).astype(o_ref.dtype)


def bn_affine_lrelu(pre, scale_b, shift_b, out_dtype=jnp.bfloat16):
    """y = leaky_relu(pre * scale + shift); per-batch-element scale/shift."""
    B, OH, OW, C = pre.shape
    s = scale_b.reshape(B, 1, C).astype(jnp.float32)
    sh = shift_b.reshape(B, 1, C).astype(jnp.float32)
    return pl.pallas_call(
        _affine_lrelu_kernel,
        out_shape=jax.ShapeDtypeStruct((B, OH, OW, C), out_dtype),
        grid=(B, OH),
        in_specs=[pl.BlockSpec((1, 1, OW, C), lambda b, h: (b, h, 0, 0)),
                  pl.BlockSpec((1, 1, C), lambda b, h: (b, 0, 0)),
                  pl.BlockSpec((1, 1, C), lambda b, h: (b, 0, 0))],
        out_specs=pl.BlockSpec((1, 1, OW, C), lambda b, h: (b, h, 0, 0)),
        compiler_params=pltpu.CompilerParams(
            dimension_semantics=("parallel", "parallel")),
    )(pre, s, sh)


def _bn_finalize(pre, s, q, gamma, beta, stats_groups):
    """Training-mode BatchNorm2d + LeakyReLU from fused per-(b, oh) partials.

    stats_groups > 1: the batch axis is the row-concatenation of independent
    discriminator calls (real / fake); statistics are computed per group so
    the result matches running the PyTorch module separately on each half."""
    B, OH, OW, OC = pre.shape           # BN layers: OCp == OC (128/256/512)
    G = stats_groups
    Bg = B // G
    s_g = s.reshape(G, Bg * OH, OC).sum(axis=1)              # (G, OC)
    q_g = q.reshape(G, Bg * OH, OC).sum(axis=1)
    count = Bg * OH * OW
    mean = s_g / count
    var = jnp.maximum(q_g / count - mean * mean, 0.0)        # clamp >= 0
    scale_g = gamma[None, :] * jax.lax.rsqrt(var + BN_EPS)
    shift_g = beta[None, :] - mean * scale_g
    gid = jnp.arange(B) // Bg
    return bn_affine_lrelu(pre, scale_g[gid], shift_g[gid])


# -------------------------- layout glue (XLA, one pass) ----------------------
# TODO(synk): fold the pad / space-to-depth re-layout into the previous
# layer's affine epilogue to remove one extra activation copy per layer.

def _pad1(x):
    return jnp.pad(x, ((0, 0), (1, 1), (1, 1), (0, 0)))


def _pad_s2d(x):
    """pad=1 then space-to-depth by 2: (B,H,W,C) -> (B,(H+2)/2,(W+2)/2,4C).
    A 4x4 stride-2 pad-1 conv on x == a 2x2 stride-1 conv on this layout."""
    B, H, W, C = x.shape
    xp = jnp.pad(x, ((0, 0), (1, 1), (1, 1), (0, 0)))
    xp = xp.reshape(B, (H + 2) // 2, 2, (W + 2) // 2, 2, C)
    xp = jnp.transpose(xp, (0, 1, 3, 2, 4, 5))
    return xp.reshape(B, (H + 2) // 2, (W + 2) // 2, 4 * C)


def conv_s2_lrelu(x, wt, bias, oc, act=True, out_dtype=jnp.bfloat16):
    y = _fused_conv(_pad_s2d(x).astype(jnp.bfloat16), wt, k=2, bias=bias,
                    act=act, out_dtype=out_dtype)
    return y[..., :oc]


def conv_s2_bn_lrelu(x, wt, gamma, beta, stats_groups):
    pre, s, q = _fused_conv(_pad_s2d(x).astype(jnp.bfloat16), wt, k=2,
                            emit_stats=True)
    return _bn_finalize(pre, s, q, gamma, beta, stats_groups)


def conv_s1_bn_lrelu(x, wt, gamma, beta, stats_groups):
    pre, s, q = _fused_conv(_pad1(x).astype(jnp.bfloat16), wt, k=4,
                            emit_stats=True)
    return _bn_finalize(pre, s, q, gamma, beta, stats_groups)


def conv_s1_bias(x, wt, bias, oc, act=False, out_dtype=jnp.float32):
    y = _fused_conv(_pad1(x).astype(jnp.bfloat16), wt, k=4, bias=bias,
                    act=act, out_dtype=out_dtype)
    return y[..., :oc]


# ------------------------------ reductions -----------------------------------

def _sq_diff_sum_kernel(a_ref, b_ref, o_ref, acc_ref):
    # NOTE: the VMEM carry across grid steps requires this axis to stay
    # "arbitrary" (sequential); marking it "parallel" would silently break it.
    i = pl.program_id(0)

    @pl.when(i == 0)
    def _():
        acc_ref[...] = jnp.zeros_like(acc_ref)

    d = a_ref[...] - b_ref[...]
    acc_ref[...] += d * d                          # pure VPU per step

    @pl.when(i == pl.num_programs(0) - 1)
    def _():
        o_ref[0, 0] = jnp.sum(acc_ref[...])        # one cross-lane reduce


def _kl_sum_kernel(m_ref, lv_ref, o_ref, acc_ref):
    i = pl.program_id(0)

    @pl.when(i == 0)
    def _():
        acc_ref[...] = jnp.zeros_like(acc_ref)

    mu = m_ref[...]
    lv = lv_ref[...]
    # 0.5 * (mu^2 + exp(logvar) - 1 - logvar); zero padding contributes 0.
    acc_ref[...] += 0.5 * (mu * mu + jnp.exp(lv) - 1.0 - lv)

    @pl.when(i == pl.num_programs(0) - 1)
    def _():
        o_ref[0, 0] = jnp.sum(acc_ref[...])


def _to_rows128(x):
    flat = jnp.ravel(x).astype(jnp.float32)
    block = 128 * ROW_TILE
    pad = (-flat.size) % block
    if pad:
        flat = jnp.concatenate([flat, jnp.zeros((pad,), jnp.float32)])
    return flat.reshape(-1, 128)


def _streamed_scalar_reduce(kernel, a, b):
    af, bf = _to_rows128(a), _to_rows128(b)
    M = af.shape[0]
    out = pl.pallas_call(
        kernel,
        out_shape=jax.ShapeDtypeStruct((1, 1), jnp.float32),
        grid=(M // ROW_TILE,),
        in_specs=[pl.BlockSpec((ROW_TILE, 128), lambda i: (i, 0)),
                  pl.BlockSpec((ROW_TILE, 128), lambda i: (i, 0))],
        out_specs=pl.BlockSpec((1, 1), lambda i: (0, 0),
                               memory_space=pltpu.SMEM),
        scratch_shapes=[pltpu.VMEM((ROW_TILE, 128), jnp.float32)],
        compiler_params=pltpu.CompilerParams(
            dimension_semantics=("arbitrary",)),
    )(af, bf)
    return out[0, 0]


def sq_diff_sum(a, b):
    return _streamed_scalar_reduce(_sq_diff_sum_kernel, a, b)


def kl_total_sum(mean, logvar):
    return _streamed_scalar_reduce(_kl_sum_kernel, mean, logvar)


# -------------------------- weight preprocessing -----------------------------

def _pad_last(a, n):
    pad = n - a.shape[-1]
    if pad == 0:
        return a
    return jnp.pad(a, [(0, 0)] * (a.ndim - 1) + [(0, pad)])


def _s2d_tap_weight(w):
    """(OC,C,4,4) stride-2 conv weight -> (4, 4C, OCp) bf16 tap matrices that
    match the space-to-depth-by-2 input re-layout (2x2 stride-1 conv)."""
    OC, C, k, _ = w.shape
    wt = jnp.transpose(w, (2, 3, 1, 0))            # (kh, kw, C, OC)
    wt = wt.reshape(2, 2, 2, 2, C, OC)             # (kh2, di, kw2, dj, C, OC)
    wt = jnp.transpose(wt, (0, 2, 1, 3, 4, 5))     # (kh2, kw2, di, dj, C, OC)
    wt = wt.reshape(4, 4 * C, OC)
    return _pad_last(wt, _round_up(OC, 128)).astype(jnp.bfloat16)


def _tap_weight(w):
    """(OC,C,k,k) stride-1 conv weight -> (k*k, C, OCp) bf16 tap matrices."""
    OC, C, k, _ = w.shape
    wt = jnp.transpose(w, (2, 3, 1, 0)).reshape(k * k, C, OC)
    return _pad_last(wt, _round_up(OC, 128)).astype(jnp.bfloat16)


def _pad_bias(b):
    return _pad_last(b.reshape(1, -1).astype(jnp.float32),
                     _round_up(b.shape[0], 128))


def init_raw_params(key, in_ch=3, ndf=64, n_layers=3):
    """weights_init: conv W ~ N(0,0.02), conv bias 0, BN gamma ~ N(1,0.02),
    BN beta 0 (deterministic given the key)."""
    chs = [in_ch, ndf]
    for n in range(1, n_layers):
        chs.append(ndf * min(2 ** n, 8))
    chs.append(ndf * min(2 ** n_layers, 8))        # [3, 64, 128, 256, 512]
    keys = jax.random.split(key, 10)
    p = {"w0": 0.02 * jax.random.normal(keys[0], (chs[1], chs[0], 4, 4),
                                        jnp.float32),
         "b0": jnp.zeros((chs[1],), jnp.float32)}
    for li in range(1, 4):
        oc, ic = chs[li + 1], chs[li]
        p[f"w{li}"] = 0.02 * jax.random.normal(keys[2 * li], (oc, ic, 4, 4),
                                               jnp.float32)
        p[f"g{li}"] = 1.0 + 0.02 * jax.random.normal(keys[2 * li + 1], (oc,),
                                                     jnp.float32)
        p[f"beta{li}"] = jnp.zeros((oc,), jnp.float32)
    p["w4"] = 0.02 * jax.random.normal(keys[8], (1, chs[4], 4, 4), jnp.float32)
    p["b4"] = jnp.zeros((1,), jnp.float32)
    return p


def preprocess_params(raw):
    """One-time per-layer weight transpose/reshape/pad into tap-matmul layout."""
    p = {"w0": _s2d_tap_weight(raw["w0"]), "b0": _pad_bias(raw["b0"]),
         "w1": _s2d_tap_weight(raw["w1"]),
         "w2": _s2d_tap_weight(raw["w2"]),
         "w3": _tap_weight(raw["w3"]),
         "w4": _tap_weight(raw["w4"]), "b4": _pad_bias(raw["b4"])}
    for li in (1, 2, 3):
        p[f"g{li}"] = raw[f"g{li}"].astype(jnp.float32)
        p[f"beta{li}"] = raw[f"beta{li}"].astype(jnp.float32)
    return p


# ------------------------------ discriminator --------------------------------

def discriminator(x_nchw, p, stats_groups=1):
    """NLayerDiscriminator(input_nc=3, ndf=64, n_layers=3, BatchNorm2d)."""
    x = jnp.transpose(x_nchw, (0, 2, 3, 1)).astype(jnp.bfloat16)  # NHWC once
    h = conv_s2_lrelu(x, p["w0"], p["b0"], oc=64)                    # 3 -> 64
    h = conv_s2_bn_lrelu(h, p["w1"], p["g1"], p["beta1"], stats_groups)  # 128
    h = conv_s2_bn_lrelu(h, p["w2"], p["g2"], p["beta2"], stats_groups)  # 256
    h = conv_s1_bn_lrelu(h, p["w3"], p["g3"], p["beta3"], stats_groups)  # 512
    logits = conv_s1_bias(h, p["w4"], p["b4"], oc=1, act=False,
                          out_dtype=jnp.float32)                     # -> 1
    return jnp.transpose(logits, (0, 3, 1, 2))                       # NCHW


# ------------------------------ loss forward ----------------------------------

def vae_with_discriminator_forward(inputs, recons, post_mean, post_logvar,
                                   params, optimizer_idx, global_step,
                                   kl_weight=1.0, disc_weight=1.0,
                                   disc_start=0, split="train"):
    """Mirrors VAEWithDiscriminator.forward (disc_loss='hinge')."""
    disc_active = jnp.where(jnp.asarray(global_step) >= disc_start, 1.0, 0.0)
    if optimizer_idx == 0:
        rec_loss = sq_diff_sum(recons, inputs) / float(inputs.size)   # MSE mean
        kl_loss = kl_total_sum(post_mean, post_logvar) / float(post_mean.shape[0])
        logits_fake = discriminator(recons, params)
        gen_loss = -jnp.mean(logits_fake)          # tiny logits: plain jnp
        loss = (rec_loss + kl_weight * kl_loss
                + disc_weight * disc_active * gen_loss)
        log = {f"{split}/rec_loss": rec_loss,
               f"{split}/kl_loss": kl_loss,
               f"{split}/gen_loss": gen_loss}
        return loss, log
    elif optimizer_idx == 1:
        # TODO(synk): disc_loss='hinge_r1' needs autograd.grad of logits_real
        # wrt the real images (differentiating through the Pallas
        # discriminator); the module's default 'hinge' loss is implemented.
        B = inputs.shape[0]
        # One discriminator pass on the concatenated real+fake batch (2x M in
        # every conv); BatchNorm stats are computed per half (stats_groups=2)
        # so the result matches two separate module calls.
        both = jnp.concatenate([inputs, recons], axis=0)
        logits = discriminator(both, params, stats_groups=2)
        logits_real, logits_fake = logits[:B], logits[B:]
        d_loss = 0.5 * (jnp.mean(jax.nn.relu(1.0 - logits_real)) +
                        jnp.mean(jax.nn.relu(1.0 + logits_fake)))
        loss = disc_active * d_loss
        log = {f"{split}/disc_loss": d_loss,
               f"{split}/disc_active": disc_active,
               f"{split}/logits_real": jnp.mean(logits_real),
               f"{split}/logits_fake": jnp.mean(logits_fake)}
        return loss, log


if __name__ == "__main__":
    key = jax.random.PRNGKey(0)
    k1, k2, k3, k4, kp = jax.random.split(key, 5)

    # Small shapes consistent with the module: discriminator input has 3
    # channels; 32x32 spatial is the smallest that cleanly survives 5 convs.
    B, C, H, W = 2, 3, 32, 32
    inputs = jax.random.normal(k1, (B, C, H, W), jnp.float32)
    recons = inputs + 0.1 * jax.random.normal(k2, (B, C, H, W), jnp.float32)
    # DiagonalGaussian posterior parameters (latent space).
    post_mean = jax.random.normal(k3, (B, 4, 8, 8), jnp.float32)
    post_logvar = 0.1 * jax.random.normal(k4, (B, 4, 8, 8), jnp.float32)

    params = preprocess_params(init_raw_params(kp))

    loss_g, log_g = vae_with_discriminator_forward(
        inputs, recons, post_mean, post_logvar, params,
        optimizer_idx=0, global_step=10)
    loss_d, log_d = vae_with_discriminator_forward(
        inputs, recons, post_mean, post_logvar, params,
        optimizer_idx=1, global_step=10)

    jax.block_until_ready((loss_g, log_g, loss_d, log_d))
    print("KERNEL_OK")
</pallas_src>

<mosaic_0001>
module attributes {stable_mosaic.version = 11 : i64} {
  func.func @_sq_diff_sum_kernel(%arg0: i32, %arg1: memref<512x128xf32, #tpu.memory_space<vmem>>, %arg2: memref<512x128xf32, #tpu.memory_space<vmem>>, %arg3: memref<1x1xf32, #tpu.memory_space<smem>>, %arg4: memref<512x128xf32, #tpu.memory_space<vmem>>) attributes {dimension_semantics = [#tpu.dimension_semantics<arbitrary>], iteration_bounds = array<i64: 1>, scalar_prefetch = 0 : i64, scratch_operands = 1 : i64, tpu.core_type = #tpu.core_type<tc>, window_params = [{transform_indices = @transform_0, window_bounds = array<i64: 512, 128>}, {transform_indices = @transform_1, window_bounds = array<i64: 512, 128>}, {transform_indices = @transform_2, window_bounds = array<i64: 1, 1>}]} {
    %c0_i32 = arith.constant 0 : i32
    %0 = arith.cmpi eq, %arg0, %c0_i32 : i32
    %1 = arith.extui %0 : i1 to i32
    %c0_i32_0 = arith.constant 0 : i32
    %2 = arith.cmpi ne, %1, %c0_i32_0 : i32
    scf.if %2 {
      %cst = arith.constant 0.000000e+00 : f32
      %13 = vector.broadcast %cst : f32 to vector<512x128xf32>
      %c0_10 = arith.constant 0 : index
      %c0_11 = arith.constant 0 : index
      %14 = vector.load %arg4[%c0_10, %c0_11] : memref<512x128xf32, #tpu.memory_space<vmem>>, vector<512x128xf32>
      tpu.vector_store %arg4[%c0_10, %c0_11], %13 {strides = array<i32>} : memref<512x128xf32, #tpu.memory_space<vmem>>, vector<512x128xf32>,
    } else {
    }
    %c0 = arith.constant 0 : index
    %c0_1 = arith.constant 0 : index
    %3 = vector.load %arg1[%c0, %c0_1] : memref<512x128xf32, #tpu.memory_space<vmem>>, vector<512x128xf32>
    %c0_2 = arith.constant 0 : index
    %c0_3 = arith.constant 0 : index
    %4 = vector.load %arg2[%c0_2, %c0_3] : memref<512x128xf32, #tpu.memory_space<vmem>>, vector<512x128xf32>
    %5 = arith.subf %3, %4 : vector<512x128xf32>
    %c0_4 = arith.constant 0 : index
    %c0_5 = arith.constant 0 : index
    %6 = vector.load %arg4[%c0_4, %c0_5] : memref<512x128xf32, #tpu.memory_space<vmem>>, vector<512x128xf32>
    %7 = arith.mulf %5, %5 : vector<512x128xf32>
    %8 = arith.addf %6, %7 : vector<512x128xf32>
    %c0_6 = arith.constant 0 : index
    %c0_7 = arith.constant 0 : index
    %9 = vector.load %arg4[%c0_6, %c0_7] : memref<512x128xf32, #tpu.memory_space<vmem>>, vector<512x128xf32>
    tpu.vector_store %arg4[%c0_6, %c0_7], %8 {strides = array<i32>} : memref<512x128xf32, #tpu.memory_space<vmem>>, vector<512x128xf32>,
    %c0_i32_8 = arith.constant 0 : i32
    %10 = arith.cmpi eq, %arg0, %c0_i32_8 : i32
    %11 = arith.extui %10 : i1 to i32
    %c0_i32_9 = arith.constant 0 : i32
    %12 = arith.cmpi ne, %11, %c0_i32_9 : i32
    scf.if %12 {
      %c0_10 = arith.constant 0 : index
      %c0_11 = arith.constant 0 : index
      %13 = vector.load %arg4[%c0_10, %c0_11] : memref<512x128xf32, #tpu.memory_space<vmem>>, vector<512x128xf32>
      %14 = vector.shape_cast %13 : vector<512x128xf32> to vector<1x512x128xf32>
      %cst = arith.constant dense<0.000000e+00> : vector<1xf32>
      %15 = vector.multi_reduction <add>, %14, %cst [1, 2] : vector<1x512x128xf32> to vector<1xf32>
      %16 = vector.shape_cast %15 : vector<1xf32> to vector<1x1x1xf32>
      %17 = vector.extract %16[0, 0, 0] : f32 from vector<1x1x1xf32>
      %c0_12 = arith.constant 0 : index
      %c0_13 = arith.constant 0 : index
      %18 = memref.load %arg3[%c0_12, %c0_13] : memref<1x1xf32, #tpu.memory_space<smem>>
      memref.store %17, %arg3[%c0_12, %c0_13] : memref<1x1xf32, #tpu.memory_space<smem>>
    } else {
    }
    return
  }
  func.func @transform_0(%arg0: i32) -> (i32, i32) {
    %c0_i32 = arith.constant 0 : i32
    %c0_i32_0 = arith.constant 0 : i32
    return %arg0, %c0_i32 : i32, i32
  }
  func.func @transform_1(%arg0: i32) -> (i32, i32) {
    %c0_i32 = arith.constant 0 : i32
    %c0_i32_0 = arith.constant 0 : i32
    return %arg0, %c0_i32 : i32, i32
  }
  func.func @transform_2(%arg0: i32) -> (i32, i32) {
    %c0_i32 = arith.constant 0 : i32
    %c0_i32_0 = arith.constant 0 : i32
    %c0_i32_1 = arith.constant 0 : i32
    return %c0_i32, %c0_i32_0 : i32, i32
  }
}

</mosaic_0001>

<llo_original>
// kernel: tpu_custom_call.1
$region0: #{tpu_custom_call.1}
  #allocation0 [shape = 'u32[]', space=smem, size = 0x4, offset = 0x4, fixed_abs, tag = 'smem constant byte address 0x4 - core index']
  #allocation1 [shape = 'u32[144,128]{1,0:T(1,128)}', space=vmem, size = 0x12000, scoped, tag = 'internal scratch']
  #allocation2 [shape = 'f32[512,128]{1,0:T(8,128)}', space=vmem, size = 0x40000, scoped, tag = 'scratch operand']
  %s0 = inlined_call_operand.hbm [shape: f32[512,128], index: 0, kind: input, shape index: {}]
  %s1 = inlined_call_operand.hbm [shape: f32[512,128], index: 1, kind: input, shape index: {}]
  %s2 = inlined_call_operand.hbm [shape: f32[1,1], index: 2, kind: output, shape index: {}]
  %s3 = sld [smem:[#allocation0]]
  $region34: #{tpu_custom_call.1} parent=0
    _
  %s5 = ssub.s32 1, %s3
  %s6 = scalar_select 0, %s5, %s3
  $region1: #{tpu_custom_call.1} parent=0
    #allocation3 [shape = 'u8[262144]{0}', space=vmem, size = 0x40000, scoped, tag = 'input window, operand 0, single buffered']
    #allocation4 [shape = 's32[1]{0}', space=sflag, size = 0x4, scoped, tag = 'scoped memory for tpu_custom_call.1']
    #allocation5 [shape = 's32[1]{0}', space=sflag, size = 0x4, scoped, tag = 'scoped memory for tpu_custom_call.1']
    #allocation6 [shape = 'u8[262144]{0}', space=vmem, size = 0x40000, scoped, tag = 'input window, operand 1, single buffered']
    #allocation7 [shape = 's32[1]{0}', space=sflag, size = 0x4, scoped, tag = 'scoped memory for tpu_custom_call.1']
    #allocation8 [shape = 'u8[512]{0}', space=smem, size = 0x200, scoped, tag = 'output window, operand 0, single buffered']
    %7 = vsyncpa [#allocation4], 0
    %8 = vsyncpa [#allocation7], 0
    %9 = vsyncpa [#allocation5], 0
    // Predicated region
    $region2: #{tpu_custom_call.1} parent=1 // pred_check
      _
    $region3: #{tpu_custom_call.1} parent=1 // pred_check_branch
      %11 = sbr.rel (0) target = $region5
    $region4: #{tpu_custom_call.1} parent=1 // pred_region
      %s13 = ssub.s32 8192, 8192
      %14 = vsyncadd [#allocation4], %s13
      %s15 = sshll.u32 [#allocation3], 4
      %s16 = int_to_ptr.vmem [resolvable:$true] %s15
      %21 = dma.hbm_to_vmem [thread:$0]  %s0, 8192, %s16, [#allocation4], 128, 128, 8
    $region5: #{tpu_custom_call.1} parent=1 // pred_fallthru
      _
    // Predicated region
    $region6: #{tpu_custom_call.1} parent=1 // pred_check
      _
    $region7: #{tpu_custom_call.1} parent=1 // pred_check_branch
      %23 = sbr.rel (0) target = $region9
    $region8: #{tpu_custom_call.1} parent=1 // pred_region
      %s25 = ssub.s32 8192, 8192
      %26 = vsyncadd [#allocation7], %s25
      %s27 = sshll.u32 [#allocation6], 4
      %s28 = int_to_ptr.vmem [resolvable:$true] %s27
      %33 = dma.hbm_to_vmem [thread:$0]  %s1, 8192, %s28, [#allocation7], 128, 128, 8
    $region9: #{tpu_custom_call.1} parent=1 // pred_fallthru
      _
    // Predicated region
    $region10: #{tpu_custom_call.1} parent=1 // pred_check
      _
    $region11: #{tpu_custom_call.1} parent=1 // pred_check_branch
      %35 = sbr.rel (0) target = $region13
    $region12: #{tpu_custom_call.1} parent=1 // pred_region
      %36 = dma.done [#allocation4], 8192
    $region13: #{tpu_custom_call.1} parent=1 // pred_fallthru
      _
    // Predicated region
    $region14: #{tpu_custom_call.1} parent=1 // pred_check
      _
    $region15: #{tpu_custom_call.1} parent=1 // pred_check_branch
      %38 = sbr.rel (0) target = $region17
    $region16: #{tpu_custom_call.1} parent=1 // pred_region
      %39 = dma.done [#allocation7], 8192
    $region17: #{tpu_custom_call.1} parent=1 // pred_fallthru
      _
    %p40 = scmp.eq.s32.totalorder 0, 0
    // Predicated region
    $region18: #{tpu_custom_call.1} parent=1 // pred_check
      %p41 = pneg %p40
    $region19: #{tpu_custom_call.1} parent=1 // pred_check_branch
      %43 = sbr.rel (%p41) target = $region21
    $region20: #{tpu_custom_call.1} parent=1 // pred_region
      %44 = vst [vmem:[#allocation2] sm:$0xff] 0.0
      %45 = vst [vmem:[#allocation2 + $0x8] sm:$0xff] 0.0
      %46 = vst [vmem:[#allocation2 + $0x10] sm:$0xff] 0.0
      %47 = vst [vmem:[#allocation2 + $0x18] sm:$0xff] 0.0
      %48 = vst [vmem:[#allocation2 + $0x20] sm:$0xff] 0.0
      %49 = vst [vmem:[#allocation2 + $0x28] sm:$0xff] 0.0
      %50 = vst [vmem:[#allocation2 + $0x30] sm:$0xff] 0.0
      %51 = vst [vmem:[#allocation2 + $0x38] sm:$0xff] 0.0
      %52 = vst [vmem:[#allocation2 + $0x40] sm:$0xff] 0.0
      %53 = vst [vmem:[#allocation2 + $0x48] sm:$0xff] 0.0
      %54 = vst [vmem:[#allocation2 + $0x50] sm:$0xff] 0.0
      %55 = vst [vmem:[#allocation2 + $0x58] sm:$0xff] 0.0
      %56 = vst [vmem:[#allocation2 + $0x60] sm:$0xff] 0.0
      %57 = vst [vmem:[#allocation2 + $0x68] sm:$0xff] 0.0
      %58 = vst [vmem:[#allocation2 + $0x70] sm:$0xff] 0.0
      %59 = vst [vmem:[#allocation2 + $0x78] sm:$0xff] 0.0
      %60 = vst [vmem:[#allocation2 + $0x80] sm:$0xff] 0.0
      %61 = vst [vmem:[#allocation2 + $0x88] sm:$0xff] 0.0
      %62 = vst [vmem:[#allocation2 + $0x90] sm:$0xff] 0.0
      %63 = vst [vmem:[#allocation2 + $0x98] sm:$0xff] 0.0
      %64 = vst [vmem:[#allocation2 + $0xa0] sm:$0xff] 0.0
      %65 = vst [vmem:[#allocation2 + $0xa8] sm:$0xff] 0.0
      %66 = vst [vmem:[#allocation2 + $0xb0] sm:$0xff] 0.0
      %67 = vst [vmem:[#allocation2 + $0xb8] sm:$0xff] 0.0
      %68 = vst [vmem:[#allocation2 + $0xc0] sm:$0xff] 0.0
      %69 = vst [vmem:[#allocation2 + $0xc8] sm:$0xff] 0.0
      %70 = vst [vmem:[#allocation2 + $0xd0] sm:$0xff] 0.0
      %71 = vst [vmem:[#allocation2 + $0xd8] sm:$0xff] 0.0
      %72 = vst [vmem:[#allocation2 + $0xe0] sm:$0xff] 0.0
      %73 = vst [vmem:[#allocation2 + $0xe8] sm:$0xff] 0.0
      %74 = vst [vmem:[#allocation2 + $0xf0] sm:$0xff] 0.0
      %75 = vst [vmem:[#allocation2 + $0xf8] sm:$0xff] 0.0
      %76 = vst [vmem:[#allocation2 + $0x100] sm:$0xff] 0.0
      %77 = vst [vmem:[#allocation2 + $0x108] sm:$0xff] 0.0
      %78 = vst [vmem:[#allocation2 + $0x110] sm:$0xff] 0.0
      %79 = vst [vmem:[#allocation2 + $0x118] sm:$0xff] 0.0
      %80 = vst [vmem:[#allocation2 + $0x120] sm:$0xff] 0.0
      %81 = vst [vmem:[#allocation2 + $0x128] sm:$0xff] 0.0
      %82 = vst [vmem:[#allocation2 + $0x130] sm:$0xff] 0.0
      %83 = vst [vmem:[#allocation2 + $0x138] sm:$0xff] 0.0
      %84 = vst [vmem:[#allocation2 + $0x140] sm:$0xff] 0.0
      %85 = vst [vmem:[#allocation2 + $0x148] sm:$0xff] 0.0
      %86 = vst [vmem:[#allocation2 + $0x150] sm:$0xff] 0.0
      %87 = vst [vmem:[#allocation2 + $0x158] sm:$0xff] 0.0
      %88 = vst [vmem:[#allocation2 + $0x160] sm:$0xff] 0.0
      %89 = vst [vmem:[#allocation2 + $0x168] sm:$0xff] 0.0
      %90 = vst [vmem:[#allocation2 + $0x170] sm:$0xff] 0.0
      %91 = vst [vmem:[#allocation2 + $0x178] sm:$0xff] 0.0
      %92 = vst [vmem:[#allocation2 + $0x180] sm:$0xff] 0.0
      %93 = vst [vmem:[#allocation2 + $0x188] sm:$0xff] 0.0
      %94 = vst [vmem:[#allocation2 + $0x190] sm:$0xff] 0.0
      %95 = vst [vmem:[#allocation2 + $0x198] sm:$0xff] 0.0
      %96 = vst [vmem:[#allocation2 + $0x1a0] sm:$0xff] 0.0
      %97 = vst [vmem:[#allocation2 + $0x1a8] sm:$0xff] 0.0
      %98 = vst [vmem:[#allocation2 + $0x1b0] sm:$0xff] 0.0
      %99 = vst [vmem:[#allocation2 + $0x1b8] sm:$0xff] 0.0
      %100 = vst [vmem:[#allocation2 + $0x1c0] sm:$0xff] 0.0
      %101 = vst [vmem:[#allocation2 + $0x1c8] sm:$0xff] 0.0
      %102 = vst [vmem:[#allocation2 + $0x1d0] sm:$0xff] 0.0
      %103 = vst [vmem:[#allocation2 + $0x1d8] sm:$0xff] 0.0
      %104 = vst [vmem:[#allocation2 + $0x1e0] sm:$0xff] 0.0
      %105 = vst [vmem:[#allocation2 + $0x1e8] sm:$0xff] 0.0
      %106 = vst [vmem:[#allocation2 + $0x1f0] sm:$0xff] 0.0
      %107 = vst [vmem:[#allocation2 + $0x1f8] sm:$0xff] 0.0
    $region21: #{tpu_custom_call.1} parent=1 // pred_fallthru
      _
    %v108 = vld [vmem:[#allocation3] sm:$0xff]
    %v109 = vld [vmem:[#allocation3 + $0x8] sm:$0xff]
    %v110 = vld [vmem:[#allocation3 + $0x10] sm:$0xff]
    %v111 = vld [vmem:[#allocation3 + $0x18] sm:$0xff]
    %v112 = vld [vmem:[#allocation3 + $0x20] sm:$0xff]
    %v113 = vld [vmem:[#allocation3 + $0x28] sm:$0xff]
    %v114 = vld [vmem:[#allocation3 + $0x30] sm:$0xff]
    %v115 = vld [vmem:[#allocation3 + $0x38] sm:$0xff]
    %v116 = vld [vmem:[#allocation3 + $0x40] sm:$0xff]
    %v117 = vld [vmem:[#allocation3 + $0x48] sm:$0xff]
    %v118 = vld [vmem:[#allocation3 + $0x50] sm:$0xff]
    %v119 = vld [vmem:[#allocation3 + $0x58] sm:$0xff]
    %v120 = vld [vmem:[#allocation3 + $0x60] sm:$0xff]
    %v121 = vld [vmem:[#allocation3 + $0x68] sm:$0xff]
    %v122 = vld [vmem:[#allocation3 + $0x70] sm:$0xff]
    %v123 = vld [vmem:[#allocation3 + $0x78] sm:$0xff]
    %v124 = vld [vmem:[#allocation3 + $0x80] sm:$0xff]
    %v125 = vld [vmem:[#allocation3 + $0x88] sm:$0xff]
    %v126 = vld [vmem:[#allocation3 + $0x90] sm:$0xff]
    %v127 = vld [vmem:[#allocation3 + $0x98] sm:$0xff]
    %v128 = vld [vmem:[#allocation3 + $0xa0] sm:$0xff]
    %v129 = vld [vmem:[#allocation3 + $0xa8] sm:$0xff]
    %v130 = vld [vmem:[#allocation3 + $0xb0] sm:$0xff]
    %v131 = vld [vmem:[#allocation3 + $0xb8] sm:$0xff]
    %v132 = vld [vmem:[#allocation3 + $0xc0] sm:$0xff]
    %v133 = vld [vmem:[#allocation3 + $0xc8] sm:$0xff]
    %v134 = vld [vmem:[#allocation3 + $0xd0] sm:$0xff]
    %v135 = vld [vmem:[#allocation3 + $0xd8] sm:$0xff]
    %v136 = vld [vmem:[#allocation3 + $0xe0] sm:$0xff]
    %v137 = vld [vmem:[#allocation3 + $0xe8] sm:$0xff]
    %v138 = vld [vmem:[#allocation3 + $0xf0] sm:$0xff]
    %v139 = vld [vmem:[#allocation3 + $0xf8] sm:$0xff]
    %v140 = vld [vmem:[#allocation3 + $0x100] sm:$0xff]
    %v141 = vld [vmem:[#allocation3 + $0x108] sm:$0xff]
    %v142 = vld [vmem:[#allocation3 + $0x110] sm:$0xff]
    %v143 = vld [vmem:[#allocation3 + $0x118] sm:$0xff]
    %v144 = vld [vmem:[#allocation3 + $0x120] sm:$0xff]
    %v145 = vld [vmem:[#allocation3 + $0x128] sm:$0xff]
    %v146 = vld [vmem:[#allocation3 + $0x130] sm:$0xff]
    %v147 = vld [vmem:[#allocation3 + $0x138] sm:$0xff]
    %v148 = vld [vmem:[#allocation3 + $0x140] sm:$0xff]
    %v149 = vld [vmem:[#allocation3 + $0x148] sm:$0xff]
    %v150 = vld [vmem:[#allocation3 + $0x150] sm:$0xff]
    %v151 = vld [vmem:[#allocation3 + $0x158] sm:$0xff]
    %v152 = vld [vmem:[#allocation3 + $0x160] sm:$0xff]
    %v153 = vld [vmem:[#allocation3 + $0x168] sm:$0xff]
    %v154 = vld [vmem:[#allocation3 + $0x170] sm:$0xff]
    %v155 = vld [vmem:[#allocation3 + $0x178] sm:$0xff]
    %v156 = vld [vmem:[#allocation3 + $0x180] sm:$0xff]
    %v157 = vld [vmem:[#allocation3 + $0x188] sm:$0xff]
    %v158 = vld [vmem:[#allocation3 + $0x190] sm:$0xff]
    %v159 = vld [vmem:[#allocation3 + $0x198] sm:$0xff]
    %v160 = vld [vmem:[#allocation3 + $0x1a0] sm:$0xff]
    %v161 = vld [vmem:[#allocation3 + $0x1a8] sm:$0xff]
    %v162 = vld [vmem:[#allocation3 + $0x1b0] sm:$0xff]
    %v163 = vld [vmem:[#allocation3 + $0x1b8] sm:$0xff]
    %v164 = vld [vmem:[#allocation3 + $0x1c0] sm:$0xff]
    %v165 = vld [vmem:[#allocation3 + $0x1c8] sm:$0xff]
    %v166 = vld [vmem:[#allocation3 + $0x1d0] sm:$0xff]
    %v167 = vld [vmem:[#allocation3 + $0x1d8] sm:$0xff]
    %v168 = vld [vmem:[#allocation3 + $0x1e0] sm:$0xff]
    %v169 = vld [vmem:[#allocation3 + $0x1e8] sm:$0xff]
    %v170 = vld [vmem:[#allocation3 + $0x1f0] sm:$0xff]
    %v171 = vld [vmem:[#allocation3 + $0x1f8] sm:$0xff]
    %v172 = vld [vmem:[#allocation6] sm:$0xff]
    %v173 = vld [vmem:[#allocation6 + $0x8] sm:$0xff]
    %v174 = vld [vmem:[#allocation6 + $0x10] sm:$0xff]
    %v175 = vld [vmem:[#allocation6 + $0x18] sm:$0xff]
    %v176 = vld [vmem:[#allocation6 + $0x20] sm:$0xff]
    %v177 = vld [vmem:[#allocation6 + $0x28] sm:$0xff]
    %v178 = vld [vmem:[#allocation6 + $0x30] sm:$0xff]
    %v179 = vld [vmem:[#allocation6 + $0x38] sm:$0xff]
    %v180 = vld [vmem:[#allocation6 + $0x40] sm:$0xff]
    %v181 = vld [vmem:[#allocation6 + $0x48] sm:$0xff]
    %v182 = vld [vmem:[#allocation6 + $0x50] sm:$0xff]
    %v183 = vld [vmem:[#allocation6 + $0x58] sm:$0xff]
    %v184 = vld [vmem:[#allocation6 + $0x60] sm:$0xff]
    %v185 = vld [vmem:[#allocation6 + $0x68] sm:$0xff]
    %v186 = vld [vmem:[#allocation6 + $0x70] sm:$0xff]
    %v187 = vld [vmem:[#allocation6 + $0x78] sm:$0xff]
    %v188 = vld [vmem:[#allocation6 + $0x80] sm:$0xff]
    %v189 = vld [vmem:[#allocation6 + $0x88] sm:$0xff]
    %v190 = vld [vmem:[#allocation6 + $0x90] sm:$0xff]
    %v191 = vld [vmem:[#allocation6 + $0x98] sm:$0xff]
    %v192 = vld [vmem:[#allocation6 + $0xa0] sm:$0xff]
    %v193 = vld [vmem:[#allocation6 + $0xa8] sm:$0xff]
    %v194 = vld [vmem:[#allocation6 + $0xb0] sm:$0xff]
    %v195 = vld [vmem:[#allocation6 + $0xb8] sm:$0xff]
    %v196 = vld [vmem:[#allocation6 + $0xc0] sm:$0xff]
    %v197 = vld [vmem:[#allocation6 + $0xc8] sm:$0xff]
    %v198 = vld [vmem:[#allocation6 + $0xd0] sm:$0xff]
    %v199 = vld [vmem:[#allocation6 + $0xd8] sm:$0xff]
    %v200 = vld [vmem:[#allocation6 + $0xe0] sm:$0xff]
    %v201 = vld [vmem:[#allocation6 + $0xe8] sm:$0xff]
    %v202 = vld [vmem:[#allocation6 + $0xf0] sm:$0xff]
    %v203 = vld [vmem:[#allocation6 + $0xf8] sm:$0xff]
    %v204 = vld [vmem:[#allocation6 + $0x100] sm:$0xff]
    %v205 = vld [vmem:[#allocation6 + $0x108] sm:$0xff]
    %v206 = vld [vmem:[#allocation6 + $0x110] sm:$0xff]
    %v207 = vld [vmem:[#allocation6 + $0x118] sm:$0xff]
    %v208 = vld [vmem:[#allocation6 + $0x120] sm:$0xff]
    %v209 = vld [vmem:[#allocation6 + $0x128] sm:$0xff]
    %v210 = vld [vmem:[#allocation6 + $0x130] sm:$0xff]
    %v211 = vld [vmem:[#allocation6 + $0x138] sm:$0xff]
    %v212 = vld [vmem:[#allocation6 + $0x140] sm:$0xff]
    %v213 = vld [vmem:[#allocation6 + $0x148] sm:$0xff]
    %v214 = vld [vmem:[#allocation6 + $0x150] sm:$0xff]
    %v215 = vld [vmem:[#allocation6 + $0x158] sm:$0xff]
    %v216 = vld [vmem:[#allocation6 + $0x160] sm:$0xff]
    %v217 = vld [vmem:[#allocation6 + $0x168] sm:$0xff]
    %v218 = vld [vmem:[#allocation6 + $0x170] sm:$0xff]
    %v219 = vld [vmem:[#allocation6 + $0x178] sm:$0xff]
    %v220 = vld [vmem:[#allocation6 + $0x180] sm:$0xff]
    %v221 = vld [vmem:[#allocation6 + $0x188] sm:$0xff]
    %v222 = vld [vmem:[#allocation6 + $0x190] sm:$0xff]
    %v223 = vld [vmem:[#allocation6 + $0x198] sm:$0xff]
    %v224 = vld [vmem:[#allocation6 + $0x1a0] sm:$0xff]
    %v225 = vld [vmem:[#allocation6 + $0x1a8] sm:$0xff]
    %v226 = vld [vmem:[#allocation6 + $0x1b0] sm:$0xff]
    %v227 = vld [vmem:[#allocation6 + $0x1b8] sm:$0xff]
    %v228 = vld [vmem:[#allocation6 + $0x1c0] sm:$0xff]
    %v229 = vld [vmem:[#allocation6 + $0x1c8] sm:$0xff]
    %v230 = vld [vmem:[#allocation6 + $0x1d0] sm:$0xff]
    %v231 = vld [vmem:[#allocation6 + $0x1d8] sm:$0xff]
    %v232 = vld [vmem:[#allocation6 + $0x1e0] sm:$0xff]
    %v233 = vld [vmem:[#allocation6 + $0x1e8] sm:$0xff]
    %v234 = vld [vmem:[#allocation6 + $0x1f0] sm:$0xff]
    %v235 = vld [vmem:[#allocation6 + $0x1f8] sm:$0xff]
    %v236 = vsub.f32 %v108, %v172
    %v237 = vsub.f32 %v109, %v173
    %v238 = vsub.f32 %v110, %v174
    %v239 = vsub.f32 %v111, %v175
    %v240 = vsub.f32 %v112, %v176
    %v241 = vsub.f32 %v113, %v177
    %v242 = vsub.f32 %v114, %v178
    %v243 = vsub.f32 %v115, %v179
    %v244 = vsub.f32 %v116, %v180
    %v245 = vsub.f32 %v117, %v181
    %v246 = vsub.f32 %v118, %v182
    %v247 = vsub.f32 %v119, %v183
    %v248 = vsub.f32 %v120, %v184
    %v249 = vsub.f32 %v121, %v185
    %v250 = vsub.f32 %v122, %v186
    %v251 = vsub.f32 %v123, %v187
    %v252 = vsub.f32 %v124, %v188
    %v253 = vsub.f32 %v125, %v189
    %v254 = vsub.f32 %v126, %v190
    %v255 = vsub.f32 %v127, %v191
    %v256 = vsub.f32 %v128, %v192
    %v257 = vsub.f32 %v129, %v193
    %v258 = vsub.f32 %v130, %v194
    %v259 = vsub.f32 %v131, %v195
    %v260 = vsub.f32 %v132, %v196
    %v261 = vsub.f32 %v133, %v197
    %v262 = vsub.f32 %v134, %v198
    %v263 = vsub.f32 %v135, %v199
    %v264 = vsub.f32 %v136, %v200
    %v265 = vsub.f32 %v137, %v201
    %v266 = vsub.f32 %v138, %v202
    %v267 = vsub.f32 %v139, %v203
    %v268 = vsub.f32 %v140, %v204
    %v269 = vsub.f32 %v141, %v205
    %v270 = vsub.f32 %v142, %v206
    %v271 = vsub.f32 %v143, %v207
    %v272 = vsub.f32 %v144, %v208
    %v273 = vsub.f32 %v145, %v209
    %v274 = vsub.f32 %v146, %v210
    %v275 = vsub.f32 %v147, %v211
    %v276 = vsub.f32 %v148, %v212
    %v277 = vsub.f32 %v149, %v213
    %v278 = vsub.f32 %v150, %v214
    %v279 = vsub.f32 %v151, %v215
    %v280 = vsub.f32 %v152, %v216
    %v281 = vsub.f32 %v153, %v217
    %v282 = vsub.f32 %v154, %v218
    %v283 = vsub.f32 %v155, %v219
    %v284 = vsub.f32 %v156, %v220
    %v285 = vsub.f32 %v157, %v221
    %v286 = vsub.f32 %v158, %v222
    %v287 = vsub.f32 %v159, %v223
    %v288 = vsub.f32 %v160, %v224
    %v289 = vsub.f32 %v161, %v225
    %v290 = vsub.f32 %v162, %v226
    %v291 = vsub.f32 %v163, %v227
    %v292 = vsub.f32 %v164, %v228
    %v293 = vsub.f32 %v165, %v229
    %v294 = vsub.f32 %v166, %v230
    %v295 = vsub.f32 %v167, %v231
    %v296 = vsub.f32 %v168, %v232
    %v297 = vsub.f32 %v169, %v233
    %v298 = vsub.f32 %v170, %v234
    %v299 = vsub.f32 %v171, %v235
    %v300 = vld [vmem:[#allocation2] sm:$0xff]
    %v301 = vld [vmem:[#allocation2 + $0x8] sm:$0xff]
    %v302 = vld [vmem:[#allocation2 + $0x10] sm:$0xff]
    %v303 = vld [vmem:[#allocation2 + $0x18] sm:$0xff]
    %v304 = vld [vmem:[#allocation2 + $0x20] sm:$0xff]
    %v305 = vld [vmem:[#allocation2 + $0x28] sm:$0xff]
    %v306 = vld [vmem:[#allocation2 + $0x30] sm:$0xff]
    %v307 = vld [vmem:[#allocation2 + $0x38] sm:$0xff]
    %v308 = vld [vmem:[#allocation2 + $0x40] sm:$0xff]
    %v309 = vld [vmem:[#allocation2 + $0x48] sm:$0xff]
    %v310 = vld [vmem:[#allocation2 + $0x50] sm:$0xff]
    %v311 = vld [vmem:[#allocation2 + $0x58] sm:$0xff]
    %v312 = vld [vmem:[#allocation2 + $0x60] sm:$0xff]
    %v313 = vld [vmem:[#allocation2 + $0x68] sm:$0xff]
    %v314 = vld [vmem:[#allocation2 + $0x70] sm:$0xff]
    %v315 = vld [vmem:[#allocation2 + $0x78] sm:$0xff]
    %v316 = vld [vmem:[#allocation2 + $0x80] sm:$0xff]
    %v317 = vld [vmem:[#allocation2 + $0x88] sm:$0xff]
    %v318 = vld [vmem:[#allocation2 + $0x90] sm:$0xff]
    %v319 = vld [vmem:[#allocation2 + $0x98] sm:$0xff]
    %v320 = vld [vmem:[#allocation2 + $0xa0] sm:$0xff]
    %v321 = vld [vmem:[#allocation2 + $0xa8] sm:$0xff]
    %v322 = vld [vmem:[#allocation2 + $0xb0] sm:$0xff]
    %v323 = vld [vmem:[#allocation2 + $0xb8] sm:$0xff]
    %v324 = vld [vmem:[#allocation2 + $0xc0] sm:$0xff]
    %v325 = vld [vmem:[#allocation2 + $0xc8] sm:$0xff]
    %v326 = vld [vmem:[#allocation2 + $0xd0] sm:$0xff]
    %v327 = vld [vmem:[#allocation2 + $0xd8] sm:$0xff]
    %v328 = vld [vmem:[#allocation2 + $0xe0] sm:$0xff]
    %v329 = vld [vmem:[#allocation2 + $0xe8] sm:$0xff]
    %v330 = vld [vmem:[#allocation2 + $0xf0] sm:$0xff]
    %v331 = vld [vmem:[#allocation2 + $0xf8] sm:$0xff]
    %v332 = vld [vmem:[#allocation2 + $0x100] sm:$0xff]
    %v333 = vld [vmem:[#allocation2 + $0x108] sm:$0xff]
    %v334 = vld [vmem:[#allocation2 + $0x110] sm:$0xff]
    %v335 = vld [vmem:[#allocation2 + $0x118] sm:$0xff]
    %v336 = vld [vmem:[#allocation2 + $0x120] sm:$0xff]
    %v337 = vld [vmem:[#allocation2 + $0x128] sm:$0xff]
    %v338 = vld [vmem:[#allocation2 + $0x130] sm:$0xff]
    %v339 = vld [vmem:[#allocation2 + $0x138] sm:$0xff]
    %v340 = vld [vmem:[#allocation2 + $0x140] sm:$0xff]
    %v341 = vld [vmem:[#allocation2 + $0x148] sm:$0xff]
    %v342 = vld [vmem:[#allocation2 + $0x150] sm:$0xff]
    %v343 = vld [vmem:[#allocation2 + $0x158] sm:$0xff]
    %v344 = vld [vmem:[#allocation2 + $0x160] sm:$0xff]
    %v345 = vld [vmem:[#allocation2 + $0x168] sm:$0xff]
    %v346 = vld [vmem:[#allocation2 + $0x170] sm:$0xff]
    %v347 = vld [vmem:[#allocation2 + $0x178] sm:$0xff]
    %v348 = vld [vmem:[#allocation2 + $0x180] sm:$0xff]
    %v349 = vld [vmem:[#allocation2 + $0x188] sm:$0xff]
    %v350 = vld [vmem:[#allocation2 + $0x190] sm:$0xff]
    %v351 = vld [vmem:[#allocation2 + $0x198] sm:$0xff]
    %v352 = vld [vmem:[#allocation2 + $0x1a0] sm:$0xff]
    %v353 = vld [vmem:[#allocation2 + $0x1a8] sm:$0xff]
    %v354 = vld [vmem:[#allocation2 + $0x1b0] sm:$0xff]
    %v355 = vld [vmem:[#allocation2 + $0x1b8] sm:$0xff]
    %v356 = vld [vmem:[#allocation2 + $0x1c0] sm:$0xff]
    %v357 = vld [vmem:[#allocation2 + $0x1c8] sm:$0xff]
    %v358 = vld [vmem:[#allocation2 + $0x1d0] sm:$0xff]
    %v359 = vld [vmem:[#allocation2 + $0x1d8] sm:$0xff]
    %v360 = vld [vmem:[#allocation2 + $0x1e0] sm:$0xff]
    %v361 = vld [vmem:[#allocation2 + $0x1e8] sm:$0xff]
    %v362 = vld [vmem:[#allocation2 + $0x1f0] sm:$0xff]
    %v363 = vld [vmem:[#allocation2 + $0x1f8] sm:$0xff]
    %v364 = vmul.f32 %v236, %v236
    %v365 = vmul.f32 %v237, %v237
    %v366 = vmul.f32 %v238, %v238
    %v367 = vmul.f32 %v239, %v239
    %v368 = vmul.f32 %v240, %v240
    %v369 = vmul.f32 %v241, %v241
    %v370 = vmul.f32 %v242, %v242
    %v371 = vmul.f32 %v243, %v243
    %v372 = vmul.f32 %v244, %v244
    %v373 = vmul.f32 %v245, %v245
    %v374 = vmul.f32 %v246, %v246
    %v375 = vmul.f32 %v247, %v247
    %v376 = vmul.f32 %v248, %v248
    %v377 = vmul.f32 %v249, %v249
    %v378 = vmul.f32 %v250, %v250
    %v379 = vmul.f32 %v251, %v251
    %v380 = vmul.f32 %v252, %v252
    %v381 = vmul.f32 %v253, %v253
    %v382 = vmul.f32 %v254, %v254
    %v383 = vmul.f32 %v255, %v255
    %v384 = vmul.f32 %v256, %v256
    %v385 = vmul.f32 %v257, %v257
    %v386 = vmul.f32 %v258, %v258
    %v387 = vmul.f32 %v259, %v259
    %v388 = vmul.f32 %v260, %v260
    %v389 = vmul.f32 %v261, %v261
    %v390 = vmul.f32 %v262, %v262
    %v391 = vmul.f32 %v263, %v263
    %v392 = vmul.f32 %v264, %v264
    %v393 = vmul.f32 %v265, %v265
    %v394 = vmul.f32 %v266, %v266
    %v395 = vmul.f32 %v267, %v267
    %v396 = vmul.f32 %v268, %v268
    %v397 = vmul.f32 %v269, %v269
    %v398 = vmul.f32 %v270, %v270
    %v399 = vmul.f32 %v271, %v271
    %v400 = vmul.f32 %v272, %v272
    %v401 = vmul.f32 %v273, %v273
    %v402 = vmul.f32 %v274, %v274
    %v403 = vmul.f32 %v275, %v275
    %v404 = vmul.f32 %v276, %v276
    %v405 = vmul.f32 %v277, %v277
    %v406 = vmul.f32 %v278, %v278
    %v407 = vmul.f32 %v279, %v279
    %v408 = vmul.f32 %v280, %v280
    %v409 = vmul.f32 %v281, %v281
    %v410 = vmul.f32 %v282, %v282
    %v411 = vmul.f32 %v283, %v283
    %v412 = vmul.f32 %v284, %v284
    %v413 = vmul.f32 %v285, %v285
    %v414 = vmul.f32 %v286, %v286
    %v415 = vmul.f32 %v287, %v287
    %v416 = vmul.f32 %v288, %v288
    %v417 = vmul.f32 %v289, %v289
    %v418 = vmul.f32 %v290, %v290
    %v419 = vmul.f32 %v291, %v291
    %v420 = vmul.f32 %v292, %v292
    %v421 = vmul.f32 %v293, %v293
    %v422 = vmul.f32 %v294, %v294
    %v423 = vmul.f32 %v295, %v295
    %v424 = vmul.f32 %v296, %v296
    %v425 = vmul.f32 %v297, %v297
    %v426 = vmul.f32 %v298, %v298
    %v427 = vmul.f32 %v299, %v299
    %v428 = vadd.f32 %v300, %v364
    %v429 = vadd.f32 %v301, %v365
    %v430 = vadd.f32 %v302, %v366
    %v431 = vadd.f32 %v303, %v367
    %v432 = vadd.f32 %v304, %v368
    %v433 = vadd.f32 %v305, %v369
    %v434 = vadd.f32 %v306, %v370
    %v435 = vadd.f32 %v307, %v371
    %v436 = vadd.f32 %v308, %v372
    %v437 = vadd.f32 %v309, %v373
    %v438 = vadd.f32 %v310, %v374
    %v439 = vadd.f32 %v311, %v375
    %v440 = vadd.f32 %v312, %v376
    %v441 = vadd.f32 %v313, %v377
    %v442 = vadd.f32 %v314, %v378
    %v443 = vadd.f32 %v315, %v379
    %v444 = vadd.f32 %v316, %v380
    %v445 = vadd.f32 %v317, %v381
    %v446 = vadd.f32 %v318, %v382
    %v447 = vadd.f32 %v319, %v383
    %v448 = vadd.f32 %v320, %v384
    %v449 = vadd.f32 %v321, %v385
    %v450 = vadd.f32 %v322, %v386
    %v451 = vadd.f32 %v323, %v387
    %v452 = vadd.f32 %v324, %v388
    %v453 = vadd.f32 %v325, %v389
    %v454 = vadd.f32 %v326, %v390
    %v455 = vadd.f32 %v327, %v391
    %v456 = vadd.f32 %v328, %v392
    %v457 = vadd.f32 %v329, %v393
    %v458 = vadd.f32 %v330, %v394
    %v459 = vadd.f32 %v331, %v395
    %v460 = vadd.f32 %v332, %v396
    %v461 = vadd.f32 %v333, %v397
    %v462 = vadd.f32 %v334, %v398
    %v463 = vadd.f32 %v335, %v399
    %v464 = vadd.f32 %v336, %v400
    %v465 = vadd.f32 %v337, %v401
    %v466 = vadd.f32 %v338, %v402
    %v467 = vadd.f32 %v339, %v403
    %v468 = vadd.f32 %v340, %v404
    %v469 = vadd.f32 %v341, %v405
    %v470 = vadd.f32 %v342, %v406
    %v471 = vadd.f32 %v343, %v407
    %v472 = vadd.f32 %v344, %v408
    %v473 = vadd.f32 %v345, %v409
    %v474 = vadd.f32 %v346, %v410
    %v475 = vadd.f32 %v347, %v411
    %v476 = vadd.f32 %v348, %v412
    %v477 = vadd.f32 %v349, %v413
    %v478 = vadd.f32 %v350, %v414
    %v479 = vadd.f32 %v351, %v415
    %v480 = vadd.f32 %v352, %v416
    %v481 = vadd.f32 %v353, %v417
    %v482 = vadd.f32 %v354, %v418
    %v483 = vadd.f32 %v355, %v419
    %v484 = vadd.f32 %v356, %v420
    %v485 = vadd.f32 %v357, %v421
    %v486 = vadd.f32 %v358, %v422
    %v487 = vadd.f32 %v359, %v423
    %v488 = vadd.f32 %v360, %v424
    %v489 = vadd.f32 %v361, %v425
    %v490 = vadd.f32 %v362, %v426
    %v491 = vadd.f32 %v363, %v427
    %492 = vst [vmem:[#allocation2] sm:$0xff] %v428
    %493 = vst [vmem:[#allocation2 + $0x8] sm:$0xff] %v429
    %494 = vst [vmem:[#allocation2 + $0x10] sm:$0xff] %v430
    %495 = vst [vmem:[#allocation2 + $0x18] sm:$0xff] %v431
    %496 = vst [vmem:[#allocation2 + $0x20] sm:$0xff] %v432
    %497 = vst [vmem:[#allocation2 + $0x28] sm:$0xff] %v433
    %498 = vst [vmem:[#allocation2 + $0x30] sm:$0xff] %v434
    %499 = vst [vmem:[#allocation2 + $0x38] sm:$0xff] %v435
    %500 = vst [vmem:[#allocation2 + $0x40] sm:$0xff] %v436
    %501 = vst [vmem:[#allocation2 + $0x48] sm:$0xff] %v437
    %502 = vst [vmem:[#allocation2 + $0x50] sm:$0xff] %v438
    %503 = vst [vmem:[#allocation2 + $0x58] sm:$0xff] %v439
    %504 = vst [vmem:[#allocation2 + $0x60] sm:$0xff] %v440
    %505 = vst [vmem:[#allocation2 + $0x68] sm:$0xff] %v441
    %506 = vst [vmem:[#allocation2 + $0x70] sm:$0xff] %v442
    %507 = vst [vmem:[#allocation2 + $0x78] sm:$0xff] %v443
    %508 = vst [vmem:[#allocation2 + $0x80] sm:$0xff] %v444
    %509 = vst [vmem:[#allocation2 + $0x88] sm:$0xff] %v445
    %510 = vst [vmem:[#allocation2 + $0x90] sm:$0xff] %v446
    %511 = vst [vmem:[#allocation2 + $0x98] sm:$0xff] %v447
    %512 = vst [vmem:[#allocation2 + $0xa0] sm:$0xff] %v448
    %513 = vst [vmem:[#allocation2 + $0xa8] sm:$0xff] %v449
    %514 = vst [vmem:[#allocation2 + $0xb0] sm:$0xff] %v450
    %515 = vst [vmem:[#allocation2 + $0xb8] sm:$0xff] %v451
    %516 = vst [vmem:[#allocation2 + $0xc0] sm:$0xff] %v452
    %517 = vst [vmem:[#allocation2 + $0xc8] sm:$0xff] %v453
    %518 = vst [vmem:[#allocation2 + $0xd0] sm:$0xff] %v454
    %519 = vst [vmem:[#allocation2 + $0xd8] sm:$0xff] %v455
    %520 = vst [vmem:[#allocation2 + $0xe0] sm:$0xff] %v456
    %521 = vst [vmem:[#allocation2 + $0xe8] sm:$0xff] %v457
    %522 = vst [vmem:[#allocation2 + $0xf0] sm:$0xff] %v458
    %523 = vst [vmem:[#allocation2 + $0xf8] sm:$0xff] %v459
    %524 = vst [vmem:[#allocation2 + $0x100] sm:$0xff] %v460
    %525 = vst [vmem:[#allocation2 + $0x108] sm:$0xff] %v461
    %526 = vst [vmem:[#allocation2 + $0x110] sm:$0xff] %v462
    %527 = vst [vmem:[#allocation2 + $0x118] sm:$0xff] %v463
    %528 = vst [vmem:[#allocation2 + $0x120] sm:$0xff] %v464
    %529 = vst [vmem:[#allocation2 + $0x128] sm:$0xff] %v465
    %530 = vst [vmem:[#allocation2 + $0x130] sm:$0xff] %v466
    %531 = vst [vmem:[#allocation2 + $0x138] sm:$0xff] %v467
    %532 = vst [vmem:[#allocation2 + $0x140] sm:$0xff] %v468
    %533 = vst [vmem:[#allocation2 + $0x148] sm:$0xff] %v469
    %534 = vst [vmem:[#allocation2 + $0x150] sm:$0xff] %v470
    %535 = vst [vmem:[#allocation2 + $0x158] sm:$0xff] %v471
    %536 = vst [vmem:[#allocation2 + $0x160] sm:$0xff] %v472
    %537 = vst [vmem:[#allocation2 + $0x168] sm:$0xff] %v473
    %538 = vst [vmem:[#allocation2 + $0x170] sm:$0xff] %v474
    %539 = vst [vmem:[#allocation2 + $0x178] sm:$0xff] %v475
    %540 = vst [vmem:[#allocation2 + $0x180] sm:$0xff] %v476
    %541 = vst [vmem:[#allocation2 + $0x188] sm:$0xff] %v477
    %542 = vst [vmem:[#allocation2 + $0x190] sm:$0xff] %v478
    %543 = vst [vmem:[#allocation2 + $0x198] sm:$0xff] %v479
    %544 = vst [vmem:[#allocation2 + $0x1a0] sm:$0xff] %v480
    %545 = vst [vmem:[#allocation2 + $0x1a8] sm:$0xff] %v481
    %546 = vst [vmem:[#allocation2 + $0x1b0] sm:$0xff] %v482
    %547 = vst [vmem:[#allocation2 + $0x1b8] sm:$0xff] %v483
    %548 = vst [vmem:[#allocation2 + $0x1c0] sm:$0xff] %v484
    %549 = vst [vmem:[#allocation2 + $0x1c8] sm:$0xff] %v485
    %550 = vst [vmem:[#allocation2 + $0x1d0] sm:$0xff] %v486
    %551 = vst [vmem:[#allocation2 + $0x1d8] sm:$0xff] %v487
    %552 = vst [vmem:[#allocation2 + $0x1e0] sm:$0xff] %v488
    %553 = vst [vmem:[#allocation2 + $0x1e8] sm:$0xff] %v489
    %554 = vst [vmem:[#allocation2 + $0x1f0] sm:$0xff] %v490
    %555 = vst [vmem:[#allocation2 + $0x1f8] sm:$0xff] %v491
    // Predicated region
    $region22: #{tpu_custom_call.1} parent=1 // pred_check
      %p556 = pneg %p40
    $region23: #{tpu_custom_call.1} parent=1 // pred_check_branch
      %558 = sbr.rel (%p556) target = $region25
    $region24: #{tpu_custom_call.1} parent=1 // pred_region
      %v559 = vld [vmem:[#allocation2] sm:$0xff]
      %v560 = vld [vmem:[#allocation2 + $0x8] sm:$0xff]
      %v561 = vld [vmem:[#allocation2 + $0x10] sm:$0xff]
      %v562 = vld [vmem:[#allocation2 + $0x18] sm:$0xff]
      %v563 = vld [vmem:[#allocation2 + $0x20] sm:$0xff]
      %v564 = vld [vmem:[#allocation2 + $0x28] sm:$0xff]
      %v565 = vld [vmem:[#allocation2 + $0x30] sm:$0xff]
      %v566 = vld [vmem:[#allocation2 + $0x38] sm:$0xff]
      %v567 = vld [vmem:[#allocation2 + $0x40] sm:$0xff]
      %v568 = vld [vmem:[#allocation2 + $0x48] sm:$0xff]
      %v569 = vld [vmem:[#allocation2 + $0x50] sm:$0xff]
      %v570 = vld [vmem:[#allocation2 + $0x58] sm:$0xff]
      %v571 = vld [vmem:[#allocation2 + $0x60] sm:$0xff]
      %v572 = vld [vmem:[#allocation2 + $0x68] sm:$0xff]
      %v573 = vld [vmem:[#allocation2 + $0x70] sm:$0xff]
      %v574 = vld [vmem:[#allocation2 + $0x78] sm:$0xff]
      %v575 = vld [vmem:[#allocation2 + $0x80] sm:$0xff]
      %v576 = vld [vmem:[#allocation2 + $0x88] sm:$0xff]
      %v577 = vld [vmem:[#allocation2 + $0x90] sm:$0xff]
      %v578 = vld [vmem:[#allocation2 + $0x98] sm:$0xff]
      %v579 = vld [vmem:[#allocation2 + $0xa0] sm:$0xff]
      %v580 = vld [vmem:[#allocation2 + $0xa8] sm:$0xff]
      %v581 = vld [vmem:[#allocation2 + $0xb0] sm:$0xff]
      %v582 = vld [vmem:[#allocation2 + $0xb8] sm:$0xff]
      %v583 = vld [vmem:[#allocation2 + $0xc0] sm:$0xff]
      %v584 = vld [vmem:[#allocation2 + $0xc8] sm:$0xff]
      %v585 = vld [vmem:[#allocation2 + $0xd0] sm:$0xff]
      %v586 = vld [vmem:[#allocation2 + $0xd8] sm:$0xff]
      %v587 = vld [vmem:[#allocation2 + $0xe0] sm:$0xff]
      %v588 = vld [vmem:[#allocation2 + $0xe8] sm:$0xff]
      %v589 = vld [vmem:[#allocation2 + $0xf0] sm:$0xff]
      %v590 = vld [vmem:[#allocation2 + $0xf8] sm:$0xff]
      %v591 = vld [vmem:[#allocation2 + $0x100] sm:$0xff]
      %v592 = vld [vmem:[#allocation2 + $0x108] sm:$0xff]
      %v593 = vld [vmem:[#allocation2 + $0x110] sm:$0xff]
      %v594 = vld [vmem:[#allocation2 + $0x118] sm:$0xff]
      %v595 = vld [vmem:[#allocation2 + $0x120] sm:$0xff]
      %v596 = vld [vmem:[#allocation2 + $0x128] sm:$0xff]
      %v597 = vld [vmem:[#allocation2 + $0x130] sm:$0xff]
      %v598 = vld [vmem:[#allocation2 + $0x138] sm:$0xff]
      %v599 = vld [vmem:[#allocation2 + $0x140] sm:$0xff]
      %v600 = vld [vmem:[#allocation2 + $0x148] sm:$0xff]
      %v601 = vld [vmem:[#allocation2 + $0x150] sm:$0xff]
      %v602 = vld [vmem:[#allocation2 + $0x158] sm:$0xff]
      %v603 = vld [vmem:[#allocation2 + $0x160] sm:$0xff]
      %v604 = vld [vmem:[#allocation2 + $0x168] sm:$0xff]
      %v605 = vld [vmem:[#allocation2 + $0x170] sm:$0xff]
      %v606 = vld [vmem:[#allocation2 + $0x178] sm:$0xff]
      %v607 = vld [vmem:[#allocation2 + $0x180] sm:$0xff]
      %v608 = vld [vmem:[#allocation2 + $0x188] sm:$0xff]
      %v609 = vld [vmem:[#allocation2 + $0x190] sm:$0xff]
      %v610 = vld [vmem:[#allocation2 + $0x198] sm:$0xff]
      %v611 = vld [vmem:[#allocation2 + $0x1a0] sm:$0xff]
      %v612 = vld [vmem:[#allocation2 + $0x1a8] sm:$0xff]
      %v613 = vld [vmem:[#allocation2 + $0x1b0] sm:$0xff]
      %v614 = vld [vmem:[#allocation2 + $0x1b8] sm:$0xff]
      %v615 = vld [vmem:[#allocation2 + $0x1c0] sm:$0xff]
      %v616 = vld [vmem:[#allocation2 + $0x1c8] sm:$0xff]
      %v617 = vld [vmem:[#allocation2 + $0x1d0] sm:$0xff]
      %v618 = vld [vmem:[#allocation2 + $0x1d8] sm:$0xff]
      %v619 = vld [vmem:[#allocation2 + $0x1e0] sm:$0xff]
      %v620 = vld [vmem:[#allocation2 + $0x1e8] sm:$0xff]
      %v621 = vld [vmem:[#allocation2 + $0x1f0] sm:$0xff]
      %v622 = vld [vmem:[#allocation2 + $0x1f8] sm:$0xff]
      %v623 = vadd.f32 %v559, %v560
      %v624 = vadd.f32 %v623, %v561
      %v625 = vadd.f32 %v624, %v562
      %v626 = vadd.f32 %v625, %v563
      %v627 = vadd.f32 %v626, %v564
      %v628 = vadd.f32 %v627, %v565
      %v629 = vadd.f32 %v628, %v566
      %v630 = vadd.f32 %v629, %v567
      %v631 = vadd.f32 %v630, %v568
      %v632 = vadd.f32 %v631, %v569
      %v633 = vadd.f32 %v632, %v570
      %v634 = vadd.f32 %v633, %v571
      %v635 = vadd.f32 %v634, %v572
      %v636 = vadd.f32 %v635, %v573
      %v637 = vadd.f32 %v636, %v574
      %v638 = vadd.f32 %v637, %v575
      %v639 = vadd.f32 %v638, %v576
      %v640 = vadd.f32 %v639, %v577
      %v641 = vadd.f32 %v640, %v578
      %v642 = vadd.f32 %v641, %v579
      %v643 = vadd.f32 %v642, %v580
      %v644 = vadd.f32 %v643, %v581
      %v645 = vadd.f32 %v644, %v582
      %v646 = vadd.f32 %v645, %v583
      %v647 = vadd.f32 %v646, %v584
      %v648 = vadd.f32 %v647, %v585
      %v649 = vadd.f32 %v648, %v586
      %v650 = vadd.f32 %v649, %v587
      %v651 = vadd.f32 %v650, %v588
      %v652 = vadd.f32 %v651, %v589
      %v653 = vadd.f32 %v652, %v590
      %v654 = vadd.f32 %v653, %v591
      %v655 = vadd.f32 %v654, %v592
      %v656 = vadd.f32 %v655, %v593
      %v657 = vadd.f32 %v656, %v594
      %v658 = vadd.f32 %v657, %v595
      %v659 = vadd.f32 %v658, %v596
      %v660 = vadd.f32 %v659, %v597
      %v661 = vadd.f32 %v660, %v598
      %v662 = vadd.f32 %v661, %v599
      %v663 = vadd.f32 %v662, %v600
      %v664 = vadd.f32 %v663, %v601
      %v665 = vadd.f32 %v664, %v602
      %v666 = vadd.f32 %v665, %v603
      %v667 = vadd.f32 %v666, %v604
      %v668 = vadd.f32 %v667, %v605
      %v669 = vadd.f32 %v668, %v606
      %v670 = vadd.f32 %v669, %v607
      %v671 = vadd.f32 %v670, %v608
      %v672 = vadd.f32 %v671, %v609
      %v673 = vadd.f32 %v672, %v610
      %v674 = vadd.f32 %v673, %v611
      %v675 = vadd.f32 %v674, %v612
      %v676 = vadd.f32 %v675, %v613
      %v677 = vadd.f32 %v676, %v614
      %v678 = vadd.f32 %v677, %v615
      %v679 = vadd.f32 %v678, %v616
      %v680 = vadd.f32 %v679, %v617
      %v681 = vadd.f32 %v680, %v618
      %v682 = vadd.f32 %v681, %v619
      %v683 = vadd.f32 %v682, %v620
      %v684 = vadd.f32 %v683, %v621
      %v685 = vadd.f32 %v684, %v622
      %686 = vadd.xlane.f32.xlu0 %v685
      %v687 = vpop.xlane.xlu0 %686
      %v688 = vrot.slane %v687, 4
      %v689 = vadd.f32 %v687, %v688
      %v690 = vrot.slane %v689, 2
      %v691 = vadd.f32 %v689, %v690
      %v692 = vrot.slane %v691, 1
      %v693 = vadd.f32 %v691, %v692
      %s694 = vtos %v693
      %s695 = scalar_lea.smem [#allocation8], 0
      %696 = sst [smem:[%s695]] %s694
    $region25: #{tpu_custom_call.1} parent=1 // pred_fallthru
      _
    // Predicated region
    $region26: #{tpu_custom_call.1} parent=1 // pred_check
      _
    $region27: #{tpu_custom_call.1} parent=1 // pred_check_branch
      %698 = sbr.rel (0) target = $region29
    $region28: #{tpu_custom_call.1} parent=1 // pred_region
      %s700 = ssub.s32 16, 16
      %701 = vsyncadd [#allocation5], %s700
      %704 = dma.smem_to_hbm [#allocation8], 16, %s2, [#allocation5]
    $region29: #{tpu_custom_call.1} parent=1 // pred_fallthru
      _
    // Predicated region
    $region30: #{tpu_custom_call.1} parent=1 // pred_check
      _
    $region31: #{tpu_custom_call.1} parent=1 // pred_check_branch
      %706 = sbr.rel (0) target = $region33
    $region32: #{tpu_custom_call.1} parent=1 // pred_region
      %707 = dma.done [#allocation5], 16
    $region33: #{tpu_custom_call.1} parent=1 // pred_fallthru
      _
    %708 = sfence
    %709 = vsyncpa [#allocation4], 1
    %710 = vsyncpa [#allocation7], 1
    %711 = vsyncpa [#allocation5], 1

</llo_original>
